<compile_context>
chip_gen: v7x
topology: tpu7x:2x2x1
jax: 0.10.0
libtpu: 0.0.40
codegen_flags: <defaults>
</compile_context>

<pallas_src>
import functools

import jax
import jax.numpy as jnp
from jax import lax
from jax.experimental import pallas as pl
from jax.experimental.pallas import tpu as pltpu


def _conv_bn_silu_kernel(*refs, TH, KH, WO):
    """Fused conv + BN shift + SiLU for one (batch, row-block) tile.

    refs (in order):
      x_body_ref : (1, TH, Wp*C1)        bf16  padded rows [hb*TH, hb*TH+TH)
      halo_ref   : (1, 8, Wp*C1)         bf16  padded rows [hb*TH+TH, +8)   (KH>1 only)
      w_ref      : (KH, Wp*C1, W*C2)     bf16  BN-folded banded conv weight
      shift_ref  : (1, W*C2)             f32   folded BN shift, tiled over W
      o_ref      : (1, TH, W*C2)         f32   output tile (lane-dense)
      slab_ref   : (TH+KH-1, Wp*C1)      bf16  VMEM scratch (body + halo rows)
    """
    x_body_ref = refs[0]
    if KH > 1:
        halo_ref = refs[1]
        idx = 2
    else:
        halo_ref = None
        idx = 1
    w_ref, shift_ref, o_ref, slab_ref = refs[idx], refs[idx + 1], refs[idx + 2], refs[idx + 3]

    # Assemble the TH + KH - 1 input rows needed by this output row block.
    slab_ref[0:TH, :] = x_body_ref[0]
    if KH > 1:
        slab_ref[TH:TH + KH - 1, :] = halo_ref[0, 0:KH - 1, :]

    # KH banded matmuls on the MXU: bf16 operands, f32 accumulation.
    acc = jnp.zeros((TH, WO), dtype=jnp.float32)
    for kh in range(KH):
        # NOTE: kh = 1.. slices are sublane-offset (small relayout of TH rows);
        # the kw shifts are folded into the banded weight, so no per-tap slices.
        acc = acc + jnp.dot(slab_ref[kh:kh + TH, :], w_ref[kh],
                            preferred_element_type=jnp.float32)

    # BN (scale already folded into the weight) + SiLU, fused.
    y = acc + shift_ref[...]
    y = y * jax.nn.sigmoid(y)
    o_ref[0] = y.astype(o_ref.dtype)


def _choose_tile_h(H8, WC, WO, KH, budget_bytes=8 * 1024 * 1024):
    """Largest multiple-of-8 divisor of H8 whose blocks fit the VMEM budget."""
    def block_bytes(th):
        body = 2 * th * WC * 2                 # input body, 2x buffered, bf16
        halo = (2 * 8 * WC * 2) if KH > 1 else 0
        wgt = 2 * KH * WC * WO * 2             # banded weight (conservatively 2x)
        out = 2 * th * WO * 4                  # output, 2x buffered, f32
        slab = (th + KH - 1) * WC * 2          # scratch slab
        acc = th * WO * 4                      # accumulator + temps
        return body + halo + wgt + out + slab + acc

    cands = [d for d in range(8, H8 + 1, 8) if H8 % d == 0]
    fitting = [d for d in cands if block_bytes(d) <= budget_bytes]
    return max(fitting) if fitting else 8


def conv_bn_silu(x_nchw, weight_oihw, gamma, beta, running_mean, running_var, eps=1e-5):
    """Equivalent of Conv.forward (eval-mode BN).  x_nchw: [N, C1, H, W] float32."""
    N, C1, H, W = x_nchw.shape
    C2, _, KH, KW = weight_oihw.shape
    ph, pw = KH // 2, KW // 2                  # autopad, d=1, stride 1
    assert KH - 1 <= 8, "kernels taller than 9 need multiple halo blocks"
    # TODO(synk): groups > 1 / dilation > 1 / stride > 1 variants of Conv are
    # not implemented here (the RepSLK Conv used in this demo is k=3, s=1, g=1).

    # ---- BN folding: conv_out * scale + shift; scale folded into the weight ----
    inv_std = 1.0 / jnp.sqrt(running_var.astype(jnp.float32) + eps)
    scale = (gamma * inv_std).astype(jnp.float32)                        # (C2,)
    shift = (beta - running_mean * scale).astype(jnp.float32)            # (C2,)

    w_hwio = jnp.transpose(weight_oihw, (2, 3, 1, 0)).astype(jnp.float32) \
        * scale[None, None, None, :]                                     # (KH, KW, C1, C2)

    Wp = W + 2 * pw
    WC = Wp * C1                               # flattened input lane dim
    WO = W * C2                                # flattened output lane dim

    # ---- banded weight: fold the KW taps into one (Wp*C1, W*C2) matmul per kh ----
    # band[a, p, i, w, o] = w_hwio[a, p - w, i, o]  if 0 <= p - w < KW else 0
    sel = (jnp.arange(Wp)[None, :, None] ==
           (jnp.arange(W)[None, None, :] + jnp.arange(KW)[:, None, None])
           ).astype(jnp.float32)                                         # (KW, Wp, W)
    w_band = jnp.einsum('kpw,akio->apiwo', sel, w_hwio)                  # (KH, Wp, C1, W, C2)
    w_band = w_band.reshape(KH, WC, WO).astype(jnp.bfloat16)

    shift_tiled = jnp.tile(shift, (W,)).reshape(1, WO)                   # f32, lane-dense

    # ---- row tiling: pad H to a multiple of 8 so row blocks are sublane aligned ----
    H8 = ((H + 7) // 8) * 8
    TH = _choose_tile_h(H8, WC, WO, KH)
    HB = H8 // TH

    Hp = H8 + (max(2 * ph, 8) if KH > 1 else 2 * ph)     # room for the 8-row halo block
    pad_bottom = Hp - ph - H

    # ---- layout / padding (bf16 operands; f32 accumulation inside the kernel) ----
    # TODO(synk): in an end-to-end NHWC model these transposes/pads could be
    # dropped or fused into neighbouring ops; kept so the interface stays NCHW.
    x_nhwc = jnp.transpose(x_nchw, (0, 2, 3, 1)).astype(jnp.bfloat16)
    x_pad = jnp.pad(x_nhwc, ((0, 0), (ph, pad_bottom), (pw, pw), (0, 0)))
    x_pad = x_pad.reshape(N, Hp, WC)                                     # (N, Hp, Wp*C1)

    kernel = functools.partial(_conv_bn_silu_kernel, TH=TH, KH=KH, WO=WO)

    in_specs = [pl.BlockSpec((1, TH, WC), lambda n, hb: (n, hb, 0))]
    inputs = [x_pad]
    if KH > 1:
        thb = TH // 8
        # sublane-aligned 8-row bottom halo block starting at row (hb+1)*TH
        in_specs.append(
            pl.BlockSpec((1, 8, WC), lambda n, hb, thb=thb: (n, (hb + 1) * thb, 0)))
        inputs.append(x_pad)                   # same HBM buffer, halo rows only re-read
    in_specs += [
        pl.BlockSpec((KH, WC, WO), lambda n, hb: (0, 0, 0)),
        pl.BlockSpec((1, WO), lambda n, hb: (0, 0)),
    ]
    inputs += [w_band, shift_tiled]

    out_specs = pl.BlockSpec((1, TH, WO), lambda n, hb: (n, hb, 0))

    grid_spec = pltpu.PrefetchScalarGridSpec(
        num_scalar_prefetch=0,
        grid=(N, HB),
        in_specs=in_specs,
        out_specs=out_specs,
        scratch_shapes=[pltpu.VMEM((TH + KH - 1, WC), jnp.bfloat16)],
    )

    out = pl.pallas_call(
        kernel,
        out_shape=jax.ShapeDtypeStruct((N, H8, WO), jnp.float32),
        grid_spec=grid_spec,
        compiler_params=pltpu.CompilerParams(
            dimension_semantics=("parallel", "parallel"),
            vmem_limit_bytes=32 * 1024 * 1024,
        ),
    )(*inputs)

    out = out[:, :H, :].reshape(N, H, W, C2)
    return jnp.transpose(out, (0, 3, 1, 2))                              # back to NCHW


def _reference(x_nchw, weight_oihw, gamma, beta, running_mean, running_var, eps=1e-5):
    """Pure-JAX f32 reference (lax conv + eval BN + SiLU)."""
    y = lax.conv_general_dilated(
        x_nchw, weight_oihw, window_strides=(1, 1), padding="SAME",
        dimension_numbers=("NCHW", "OIHW", "NCHW"),
        precision=lax.Precision.HIGHEST)
    inv_std = 1.0 / jnp.sqrt(running_var + eps)
    y = (y - running_mean[None, :, None, None]) * (gamma * inv_std)[None, :, None, None] \
        + beta[None, :, None, None]
    return y * jax.nn.sigmoid(y)


if __name__ == "__main__":
    # Conv(c1=4, c2=8, k=3, s=1) — deterministic synthetic parameters.
    N, C1, C2, H, W, K = 2, 4, 8, 16, 16, 3

    key = jax.random.PRNGKey(0)
    kx, kwt, kg, kb, km, kv = jax.random.split(key, 6)

    x = jax.random.normal(kx, (N, C1, H, W), dtype=jnp.float32)
    weight = jax.random.normal(kwt, (C2, C1, K, K), dtype=jnp.float32) * 0.1
    gamma = 1.0 + 0.1 * jax.random.normal(kg, (C2,), dtype=jnp.float32)
    beta = 0.1 * jax.random.normal(kb, (C2,), dtype=jnp.float32)
    running_mean = 0.1 * jax.random.normal(km, (C2,), dtype=jnp.float32)
    running_var = jnp.abs(1.0 + 0.1 * jax.random.normal(kv, (C2,), dtype=jnp.float32))
    # NOTE: BatchNorm is applied with fixed (eval-mode) statistics; PyTorch
    # training-mode batch statistics are not reproduced here.

    out = jax.block_until_ready(
        conv_bn_silu(x, weight, gamma, beta, running_mean, running_var))
    assert out.shape == (N, C2, H, W), out.shape

    # ---- check 1: "matched" reference with the same bf16 operand rounding ----
    eps = 1e-5
    inv_std = 1.0 / jnp.sqrt(running_var + eps)
    scale = gamma * inv_std
    shift = beta - running_mean * scale
    w_fold = (weight * scale[:, None, None, None]).astype(jnp.bfloat16).astype(jnp.float32)
    x_bf = x.astype(jnp.bfloat16).astype(jnp.float32)
    y = lax.conv_general_dilated(
        x_bf, w_fold, window_strides=(1, 1), padding="SAME",
        dimension_numbers=("NCHW", "OIHW", "NCHW"),
        precision=lax.Precision.HIGHEST)
    ref_m = y + shift[None, :, None, None]
    ref_m = ref_m * jax.nn.sigmoid(ref_m)
    err_m = float(jnp.max(jnp.abs(out - ref_m)))
    assert jnp.allclose(out, ref_m, rtol=2e-3, atol=2e-3), err_m

    # ---- check 2: full f32 module reference (looser tol: kernel uses bf16 ops) ----
    ref = _reference(x, weight, gamma, beta, running_mean, running_var, eps)
    err = float(jnp.max(jnp.abs(out - ref)))
    assert jnp.allclose(out, ref, rtol=3e-2, atol=3e-2), err

    print("KERNEL_OK")
</pallas_src>

<mosaic_0001>
module attributes {stable_mosaic.version = 11 : i64} {
  func.func @_conv_bn_silu_kernel(%arg0: i32, %arg1: i32, %arg2: memref<1x16x72xbf16, #tpu.memory_space<vmem>>, %arg3: memref<1x8x72xbf16, #tpu.memory_space<vmem>>, %arg4: memref<3x72x128xbf16, #tpu.memory_space<vmem>>, %arg5: memref<1x128xf32, #tpu.memory_space<vmem>>, %arg6: memref<1x16x128xf32, #tpu.memory_space<vmem>>, %arg7: memref<18x72xbf16, #tpu.memory_space<vmem>>) attributes {dimension_semantics = [#tpu.dimension_semantics<parallel>, #tpu.dimension_semantics<parallel>], iteration_bounds = array<i64: 2, 1>, scalar_prefetch = 0 : i64, scratch_operands = 1 : i64, tpu.core_type = #tpu.core_type<tc>, window_params = [{transform_indices = @transform_0, window_bounds = array<i64: 1, 16, 72>}, {transform_indices = @transform_1, window_bounds = array<i64: 1, 8, 72>}, {pipeline_mode = #tpu.pipeline_mode<synchronous>, transform_indices = @transform_2, window_bounds = array<i64: 3, 72, 128>}, {pipeline_mode = #tpu.pipeline_mode<synchronous>, transform_indices = @transform_3, window_bounds = array<i64: 1, 128>}, {transform_indices = @transform_4, window_bounds = array<i64: 1, 16, 128>}]} {
    %c0 = arith.constant 0 : index
    %c0_0 = arith.constant 0 : index
    %c0_1 = arith.constant 0 : index
    %0 = vector.load %arg2[%c0, %c0_0, %c0_1] : memref<1x16x72xbf16, #tpu.memory_space<vmem>>, vector<1x16x72xbf16>
    %1 = vector.shape_cast %0 : vector<1x16x72xbf16> to vector<16x72xbf16>
    %c0_2 = arith.constant 0 : index
    %c0_3 = arith.constant 0 : index
    %2 = vector.load %arg7[%c0_2, %c0_3] : memref<18x72xbf16, #tpu.memory_space<vmem>>, vector<16x72xbf16>
    tpu.vector_store %arg7[%c0_2, %c0_3], %1 {strides = array<i32>} : memref<18x72xbf16, #tpu.memory_space<vmem>>, vector<16x72xbf16>,
    %c0_4 = arith.constant 0 : index
    %c0_5 = arith.constant 0 : index
    %c0_6 = arith.constant 0 : index
    %3 = vector.load %arg3[%c0_4, %c0_5, %c0_6] : memref<1x8x72xbf16, #tpu.memory_space<vmem>>, vector<1x2x72xbf16>
    %4 = vector.shape_cast %3 : vector<1x2x72xbf16> to vector<2x72xbf16>
    %c16 = arith.constant 16 : index
    %c0_7 = arith.constant 0 : index
    %5 = vector.load %arg7[%c16, %c0_7] : memref<18x72xbf16, #tpu.memory_space<vmem>>, vector<2x72xbf16>
    tpu.vector_store %arg7[%c16, %c0_7], %4 {strides = array<i32>} : memref<18x72xbf16, #tpu.memory_space<vmem>>, vector<2x72xbf16>,
    %cst = arith.constant 0.000000e+00 : f32
    %6 = vector.broadcast %cst : f32 to vector<16x128xf32>
    %c0_8 = arith.constant 0 : index
    %c0_9 = arith.constant 0 : index
    %7 = vector.load %arg7[%c0_8, %c0_9] : memref<18x72xbf16, #tpu.memory_space<vmem>>, vector<16x72xbf16>
    %c0_10 = arith.constant 0 : index
    %c0_11 = arith.constant 0 : index
    %c0_12 = arith.constant 0 : index
    %8 = vector.load %arg4[%c0_10, %c0_11, %c0_12] : memref<3x72x128xbf16, #tpu.memory_space<vmem>>, vector<1x72x128xbf16>
    %9 = vector.shape_cast %8 : vector<1x72x128xbf16> to vector<72x128xbf16>
    %cst_13 = arith.constant dense<0.000000e+00> : vector<16x128xf32>
    %10 = tpu.matmul %7, %9, %cst_13 {dimension_numbers = #tpu.dot_dimension_numbers<[1], [0], [0], [1], [0, 0, 1, 1], [], []>} : vector<16x72xbf16>, vector<72x128xbf16>, vector<16x128xf32> -> vector<16x128xf32>
    %11 = arith.addf %6, %10 : vector<16x128xf32>
    %c1 = arith.constant 1 : index
    %c0_14 = arith.constant 0 : index
    %12 = vector.load %arg7[%c1, %c0_14] : memref<18x72xbf16, #tpu.memory_space<vmem>>, vector<16x72xbf16>
    %c1_15 = arith.constant 1 : index
    %c0_16 = arith.constant 0 : index
    %c0_17 = arith.constant 0 : index
    %13 = vector.load %arg4[%c1_15, %c0_16, %c0_17] : memref<3x72x128xbf16, #tpu.memory_space<vmem>>, vector<1x72x128xbf16>
    %14 = vector.shape_cast %13 : vector<1x72x128xbf16> to vector<72x128xbf16>
    %cst_18 = arith.constant dense<0.000000e+00> : vector<16x128xf32>
    %15 = tpu.matmul %12, %14, %cst_18 {dimension_numbers = #tpu.dot_dimension_numbers<[1], [0], [0], [1], [0, 0, 1, 1], [], []>} : vector<16x72xbf16>, vector<72x128xbf16>, vector<16x128xf32> -> vector<16x128xf32>
    %16 = arith.addf %11, %15 : vector<16x128xf32>
    %c2 = arith.constant 2 : index
    %c0_19 = arith.constant 0 : index
    %17 = vector.load %arg7[%c2, %c0_19] : memref<18x72xbf16, #tpu.memory_space<vmem>>, vector<16x72xbf16>
    %c2_20 = arith.constant 2 : index
    %c0_21 = arith.constant 0 : index
    %c0_22 = arith.constant 0 : index
    %18 = vector.load %arg4[%c2_20, %c0_21, %c0_22] : memref<3x72x128xbf16, #tpu.memory_space<vmem>>, vector<1x72x128xbf16>
    %19 = vector.shape_cast %18 : vector<1x72x128xbf16> to vector<72x128xbf16>
    %cst_23 = arith.constant dense<0.000000e+00> : vector<16x128xf32>
    %20 = tpu.matmul %17, %19, %cst_23 {dimension_numbers = #tpu.dot_dimension_numbers<[1], [0], [0], [1], [0, 0, 1, 1], [], []>} : vector<16x72xbf16>, vector<72x128xbf16>, vector<16x128xf32> -> vector<16x128xf32>
    %21 = arith.addf %16, %20 : vector<16x128xf32>
    %c0_24 = arith.constant 0 : index
    %c0_25 = arith.constant 0 : index
    %22 = vector.load %arg5[%c0_24, %c0_25] : memref<1x128xf32, #tpu.memory_space<vmem>>, vector<1x128xf32>
    %23 = vector.broadcast %22 : vector<1x128xf32> to vector<16x128xf32>
    %24 = arith.addf %21, %23 : vector<16x128xf32>
    %25 = arith.negf %24 : vector<16x128xf32>
    %26 = math.exp %25 : vector<16x128xf32>
    %cst_26 = arith.constant 1.000000e+00 : f32
    %27 = vector.broadcast %cst_26 : f32 to vector<16x128xf32>
    %28 = arith.addf %27, %26 : vector<16x128xf32>
    %29 = arith.divf %27, %28 : vector<16x128xf32>
    %30 = arith.mulf %24, %29 : vector<16x128xf32>
    %c0_27 = arith.constant 0 : index
    %c0_28 = arith.constant 0 : index
    %c0_29 = arith.constant 0 : index
    %31 = vector.load %arg6[%c0_27, %c0_28, %c0_29] : memref<1x16x128xf32, #tpu.memory_space<vmem>>, vector<1x16x128xf32>
    %32 = vector.shape_cast %31 : vector<1x16x128xf32> to vector<16x128xf32>
    %33 = vector.shape_cast %30 : vector<16x128xf32> to vector<1x16x128xf32>
    tpu.vector_store %arg6[%c0_27, %c0_28, %c0_29], %33 {strides = array<i32>} : memref<1x16x128xf32, #tpu.memory_space<vmem>>, vector<1x16x128xf32>,
    return
  }
  func.func @transform_0(%arg0: i32, %arg1: i32) -> (i32, i32, i32) {
    %c0_i32 = arith.constant 0 : i32
    %c0_i32_0 = arith.constant 0 : i32
    return %arg0, %arg1, %c0_i32 : i32, i32, i32
  }
  func.func @transform_1(%arg0: i32, %arg1: i32) -> (i32, i32, i32) {
    %c1_i32 = arith.constant 1 : i32
    %0 = arith.addi %arg1, %c1_i32 : i32
    %c2_i32 = arith.constant 2 : i32
    %1 = arith.muli %0, %c2_i32 : i32
    %c0_i32 = arith.constant 0 : i32
    %c0_i32_0 = arith.constant 0 : i32
    return %arg0, %1, %c0_i32 : i32, i32, i32
  }
  func.func @transform_2(%arg0: i32, %arg1: i32) -> (i32, i32, i32) {
    %c0_i32 = arith.constant 0 : i32
    %c0_i32_0 = arith.constant 0 : i32
    %c0_i32_1 = arith.constant 0 : i32
    %c0_i32_2 = arith.constant 0 : i32
    return %c0_i32, %c0_i32_0, %c0_i32_1 : i32, i32, i32
  }
  func.func @transform_3(%arg0: i32, %arg1: i32) -> (i32, i32) {
    %c0_i32 = arith.constant 0 : i32
    %c0_i32_0 = arith.constant 0 : i32
    %c0_i32_1 = arith.constant 0 : i32
    return %c0_i32, %c0_i32_0 : i32, i32
  }
  func.func @transform_4(%arg0: i32, %arg1: i32) -> (i32, i32, i32) {
    %c0_i32 = arith.constant 0 : i32
    %c0_i32_0 = arith.constant 0 : i32
    return %arg0, %arg1, %c0_i32 : i32, i32, i32
  }
}

</mosaic_0001>

<llo_original>
// kernel: tpu_custom_call.1
$region0: #{tpu_custom_call.1}
  #allocation0 [shape = 'u32[]', space=smem, size = 0x4, offset = 0x4, fixed_abs, tag = 'smem constant byte address 0x4 - core index']
  #allocation1 [shape = 'u32[144,128]{1,0:T(1,128)}', space=vmem, size = 0x12000, scoped, tag = 'internal scratch']
  #allocation2 [shape = 'bf16[18,72]{1,0:T(8,128)(2,1)}', space=vmem, size = 0x1800, scoped, tag = 'scratch operand']
  %s0 = inlined_call_operand.hbm [shape: bf16[2,24,72], index: 0, kind: input, shape index: {}]
  %s1 = inlined_call_operand.hbm [shape: bf16[2,24,72], index: 1, kind: input, shape index: {}]
  %s2 = inlined_call_operand.hbm [shape: bf16[3,72,128], index: 2, kind: input, shape index: {}]
  %s3 = inlined_call_operand.vmem [shape: f32[1,128], index: 3, kind: input, shape index: {}]
  %s4 = inlined_call_operand.hbm [shape: f32[2,16,128], index: 4, kind: output, shape index: {}]
  %s5 = sld [smem:[#allocation0]]
  $region61: #{tpu_custom_call.1} parent=0
    _
  %s7 = ssub.s32 1, %s5
  %s8 = scalar_select 0, %s7, %s5
  $region1: #{tpu_custom_call.1} parent=0
    #allocation3 [shape = 'u8[8192]{0}', space=vmem, size = 0x2000, scoped, tag = 'input window, operand 0']
    #allocation4 [shape = 's32[2]{0}', space=sflag, size = 0x8, scoped, tag = 'scoped memory for tpu_custom_call.1']
    #allocation5 [shape = 's32[2]{0}', space=sflag, size = 0x8, scoped, tag = 'scoped memory for tpu_custom_call.1']
    #allocation6 [shape = 'u8[4096]{0}', space=vmem, size = 0x1000, scoped, tag = 'input window, operand 1']
    #allocation7 [shape = 's32[2]{0}', space=sflag, size = 0x8, scoped, tag = 'scoped memory for tpu_custom_call.1']
    #allocation8 [shape = 'u8[55296]{0}', space=vmem, size = 0xd800, scoped, tag = 'input window, operand 2, single buffered']
    #allocation9 [shape = 'u8[16384]{0}', space=vmem, size = 0x4000, scoped, tag = 'output window, operand 0']
    %9 = vsyncpa [#allocation4], 0
    %s10 = scalar_lea.sflag [#allocation4], 1
    %11 = vsyncpa %s10, 0
    %12 = vsyncpa [#allocation7], 0
    %s13 = scalar_lea.sflag [#allocation7], 1
    %14 = vsyncpa %s13, 0
    %15 = vsyncpa [#allocation5], 0
    %s16 = scalar_lea.sflag [#allocation5], 1
    %17 = vsyncpa %s16, 0
    loop: start=0, step=1, limit=4
    $region2: #{tpu_custom_call.1} parent=1 // loop_pre_header
      _
    $region3: #{tpu_custom_call.1} parent=1 // loop_header
      %s19 = sphi 0, %s23
      %p20 = scmp.ge.s32.totalorder %s19, 4
      %s26 = sphi 0, %s38
      %s27 = sphi 0, %s34
      %s28 = sphi 0, %s26
      %s29 = sphi 0, %s27
      %s30 = sphi 0, %s28
      %s31 = sphi 0, %s29
      %s43 = sphi 0, %s45
      %s46 = sphi 0, %s43
      %s47 = sphi 0, %s46
      %s63 = sphi 0, %s47
      %s75 = sphi 0, %s77
      %s78 = sphi 0, %s75
      %s79 = sphi 0, %s78
      %s95 = sphi 0, %s79
      %s99 = sphi 0, %s99
      %s101 = sphi 0, %s99
      %s102 = sphi 0, %s101
      %s116 = sphi 0, %s102
      %s120 = sphi 0, %s120
      %s122 = sphi 0, %s120
      %s123 = sphi 0, %s122
      %s137 = sphi 0, %s123
      %s145 = sphi 0, %s147
      %s148 = sphi 0, %s145
      %s149 = sphi 0, %s148
      %s165 = sphi 0, %s149
    $region4: #{tpu_custom_call.1} parent=1 // loop_header_branch
      %22 = sbr.rel (%p20) target = $region8
    $region5: #{tpu_custom_call.1} parent=1 // loop_body
      %s24 = ssub.s32 %s19, 1
      %s25 = ssub.s32 %s19, 2
      %s32 = sadd.s32 1, %s27
      %p33 = scmp.ge.s32.totalorder %s32, 1
      %s34 = scalar_select %p33, 0, %s32
      %s35 = sadd.s32 1, %s26
      %s36 = scalar_select %p33, %s35, %s26
      %p37 = scmp.ge.s32.totalorder %s36, 2
      %s38 = scalar_select %p37, 0, %s36
      %s39 = ssub.s32 %s26, %s38
      %s40 = ssub.s32 %s27, %s34
      %s41 = sor.u32 %s39, %s40
      %p42 = scmp.eq.s32.totalorder %s41, 0
      %s44 = sadd.s32 %s43, 1
      %s45 = scalar_select %p42, %s43, %s44
      %p48 = pneg %p42
      %p49 = scmp.eq.s32.totalorder %s19, 1
      %p50 = por %p48, %p49
      %p51 = scmp.ne.s32.totalorder %s43, %s46
      %p52 = scmp.eq.s32.totalorder %s19, 0
      %p53 = por %p51, %p52
      %p54 = scmp.ne.s32.totalorder %s43, %s46
      %p55 = scmp.eq.s32.totalorder %s24, 1
      %p56 = por %p54, %p55
      %p57 = scmp.ne.s32.totalorder %s46, %s47
      %p58 = scmp.eq.s32.totalorder %s24, 0
      %p59 = por %p57, %p58
      %p60 = scmp.ne.s32.totalorder %s46, %s47
      %p61 = scmp.eq.s32.totalorder %s25, 1
      %p62 = por %p60, %p61
      %p64 = scmp.ne.s32.totalorder %s47, %s63
      %p65 = scmp.eq.s32.totalorder %s25, 0
      %p66 = por %p64, %p65
      %s67 = sadd.s32 %s27, 1
      %s68 = smul.u32 %s67, 2
      %s69 = sadd.s32 %s34, 1
      %s70 = smul.u32 %s69, 2
      %s71 = ssub.s32 %s26, %s38
      %s72 = ssub.s32 %s68, %s70
      %s73 = sor.u32 %s71, %s72
      %p74 = scmp.eq.s32.totalorder %s73, 0
      %s76 = sadd.s32 %s75, 1
      %s77 = scalar_select %p74, %s75, %s76
      %p80 = pneg %p74
      %p81 = scmp.eq.s32.totalorder %s19, 1
      %p82 = por %p80, %p81
      %p83 = scmp.ne.s32.totalorder %s75, %s78
      %p84 = scmp.eq.s32.totalorder %s19, 0
      %p85 = por %p83, %p84
      %p86 = scmp.ne.s32.totalorder %s75, %s78
      %p87 = scmp.eq.s32.totalorder %s24, 1
      %p88 = por %p86, %p87
      %p89 = scmp.ne.s32.totalorder %s78, %s79
      %p90 = scmp.eq.s32.totalorder %s24, 0
      %p91 = por %p89, %p90
      %p92 = scmp.ne.s32.totalorder %s78, %s79
      %p93 = scmp.eq.s32.totalorder %s25, 1
      %p94 = por %p92, %p93
      %p96 = scmp.ne.s32.totalorder %s79, %s95
      %p97 = scmp.eq.s32.totalorder %s25, 0
      %p98 = por %p96, %p97
      %s100 = sadd.s32 %s99, 1
      %p103 = scmp.eq.s32.totalorder %s19, 1
      %p104 = scmp.ne.s32.totalorder %s99, %s101
      %p105 = scmp.eq.s32.totalorder %s19, 0
      %p106 = por %p104, %p105
      %p107 = scmp.ne.s32.totalorder %s99, %s101
      %p108 = scmp.eq.s32.totalorder %s24, 1
      %p109 = por %p107, %p108
      %p110 = scmp.ne.s32.totalorder %s101, %s102
      %p111 = scmp.eq.s32.totalorder %s24, 0
      %p112 = por %p110, %p111
      %p113 = scmp.ne.s32.totalorder %s101, %s102
      %p114 = scmp.eq.s32.totalorder %s25, 1
      %p115 = por %p113, %p114
      %p117 = scmp.ne.s32.totalorder %s102, %s116
      %p118 = scmp.eq.s32.totalorder %s25, 0
      %p119 = por %p117, %p118
      %s121 = sadd.s32 %s120, 1
      %p124 = scmp.eq.s32.totalorder %s19, 1
      %p125 = scmp.ne.s32.totalorder %s120, %s122
      %p126 = scmp.eq.s32.totalorder %s19, 0
      %p127 = por %p125, %p126
      %p128 = scmp.ne.s32.totalorder %s120, %s122
      %p129 = scmp.eq.s32.totalorder %s24, 1
      %p130 = por %p128, %p129
      %p131 = scmp.ne.s32.totalorder %s122, %s123
      %p132 = scmp.eq.s32.totalorder %s24, 0
      %p133 = por %p131, %p132
      %p134 = scmp.ne.s32.totalorder %s122, %s123
      %p135 = scmp.eq.s32.totalorder %s25, 1
      %p136 = por %p134, %p135
      %p138 = scmp.ne.s32.totalorder %s123, %s137
      %p139 = scmp.eq.s32.totalorder %s25, 0
      %p140 = por %p138, %p139
      %s141 = ssub.s32 %s26, %s38
      %s142 = ssub.s32 %s27, %s34
      %s143 = sor.u32 %s141, %s142
      %p144 = scmp.eq.s32.totalorder %s143, 0
      %s146 = sadd.s32 %s145, 1
      %s147 = scalar_select %p144, %s145, %s146
      %p150 = pneg %p144
      %p151 = scmp.eq.s32.totalorder %s19, 1
      %p152 = por %p150, %p151
      %p153 = scmp.ne.s32.totalorder %s145, %s148
      %p154 = scmp.eq.s32.totalorder %s19, 0
      %p155 = por %p153, %p154
      %p156 = scmp.ne.s32.totalorder %s145, %s148
      %p157 = scmp.eq.s32.totalorder %s24, 1
      %p158 = por %p156, %p157
      %p159 = scmp.ne.s32.totalorder %s148, %s149
      %p160 = scmp.eq.s32.totalorder %s24, 0
      %p161 = por %p159, %p160
      %p162 = scmp.ne.s32.totalorder %s148, %s149
      %p163 = scmp.eq.s32.totalorder %s25, 1
      %p164 = por %p162, %p163
      %p166 = scmp.ne.s32.totalorder %s149, %s165
      %p167 = scmp.eq.s32.totalorder %s25, 0
      %p168 = por %p166, %p167
      %p169 = scmp.le.s32.totalorder 1, %s19
      %p170 = scmp.lt.s32.totalorder %s19, 3
      %p171 = pnand %p169, %p170
      %p172 = pneg %p171
      // Predicated region
      $region9: #{tpu_custom_call.1} parent=5 // pred_check
        _
      $region10: #{tpu_custom_call.1} parent=5 // pred_check_branch
        %174 = sbr.rel (%p171) target = $region12
      $region11: #{tpu_custom_call.1} parent=5 // pred_region
        %s175 = ssub.s32 %s19, 1
        // Predicated region
        $region13: #{tpu_custom_call.1} parent=11 // pred_check
          %p176 = pneg %p112
        $region14: #{tpu_custom_call.1} parent=11 // pred_check_branch
          %178 = sbr.rel (%p176) target = $region16
        $region15: #{tpu_custom_call.1} parent=11 // pred_region
          %s180 = ssub.s32 1728, 1728
          %181 = vsyncadd [#allocation7], %s180
          %s182 = sshll.u32 [#allocation8], 4
          %s183 = int_to_ptr.vmem [resolvable:$true] %s182
          %188 = dma.hbm_to_vmem [thread:$0]  %s2, 1728, %s183, [#allocation7], 64, 64, 4
        $region16: #{tpu_custom_call.1} parent=11 // pred_fallthru
          _
        // Predicated region
        $region17: #{tpu_custom_call.1} parent=11 // pred_check
          %p189 = pneg %p133
        $region18: #{tpu_custom_call.1} parent=11 // pred_check_branch
          %191 = sbr.rel (%p189) target = $region20
        $region19: #{tpu_custom_call.1} parent=11 // pred_region
          _
        $region20: #{tpu_custom_call.1} parent=11 // pred_fallthru
          _
      $region12: #{tpu_custom_call.1} parent=5 // pred_fallthru
        _
      %p192 = scmp.lt.s32.totalorder %s19, 2
      // Predicated region
      $region21: #{tpu_custom_call.1} parent=5 // pred_check
        %p193 = pneg %p192
      $region22: #{tpu_custom_call.1} parent=5 // pred_check_branch
        %195 = sbr.rel (%p193) target = $region24
      $region23: #{tpu_custom_call.1} parent=5 // pred_region
        // Predicated region
        $region25: #{tpu_custom_call.1} parent=23 // pred_check
          %p196 = pneg %p53
        $region26: #{tpu_custom_call.1} parent=23 // pred_check_branch
          %198 = sbr.rel (%p196) target = $region28
        $region27: #{tpu_custom_call.1} parent=23 // pred_region
          %s199 = sand.u32 %s43, 1
          %s200 = scalar_lea.sflag [#allocation4], %s199
          %s201 = sand.u32 %s43, 1
          %s202 = smul.addr %s201, 8
          %s203 = scalar_lea.vmem [#allocation3], %s202
          %s204 = smul.u32 2, %s27
          %s205 = ssub.s32 3, %s204
          %p206 = scmp.lt.s32.totalorder %s205, 2
          %s207 = scalar_select %p206, %s205, 2
          %s208 = smul.u32 64, %s207
          %s210 = ssub.s32 128, %s208
          %211 = vsyncadd %s200, %s210
          %p212 = scmp.ne.s32.totalorder 0, %s208
          %s213 = smul.addr %s26, 3
          %s214 = sadd.s32 %s204, %s213
          %s215 = smul.addr %s214, 64
          %s216 = scalar_lea.hbm %s0, %s215
          %s217 = smul.u32 4, %s207
          %s218 = sshll.u32 %s203, 4
          %s219 = int_to_ptr.vmem [resolvable:$true] %s218
          %s220 = sshll.u32 %s217, 4
          %224 = dma.hbm_to_vmem [thread:$0]  (%p212), %s216, %s220, %s219, %s200, 64, 64, 4
        $region28: #{tpu_custom_call.1} parent=23 // pred_fallthru
          _
        // Predicated region
        $region29: #{tpu_custom_call.1} parent=23 // pred_check
          %p225 = pneg %p85
        $region30: #{tpu_custom_call.1} parent=23 // pred_check_branch
          %227 = sbr.rel (%p225) target = $region32
        $region31: #{tpu_custom_call.1} parent=23 // pred_region
          %s228 = sand.u32 %s19, 1
          %s229 = scalar_lea.sflag [#allocation7], %s228
          %s230 = sand.u32 %s75, 1
          %s231 = smul.addr %s230, 4
          %s232 = scalar_lea.vmem [#allocation6], %s231
          %s233 = sadd.s32 %s27, 1
          %s234 = smul.u32 %s233, 2
          %s236 = ssub.s32 64, 64
          %237 = vsyncadd %s229, %s236
          %s238 = smul.addr %s26, 3
          %s239 = sadd.s32 %s234, %s238
          %s240 = smul.addr %s239, 64
          %s241 = scalar_lea.hbm %s1, %s240
          %s243 = sshll.u32 %s232, 4
          %s244 = int_to_ptr.vmem [resolvable:$true] %s243
          %246 = dma.hbm_to_vmem [thread:$0]  %s241, 64, %s244, %s229
        $region32: #{tpu_custom_call.1} parent=23 // pred_fallthru
          _
      $region24: #{tpu_custom_call.1} parent=5 // pred_fallthru
        _
      %p247 = scmp.le.s32.totalorder 1, %s19
      %p248 = scmp.lt.s32.totalorder %s19, 3
      %p249 = pnand %p247, %p248
      %p250 = pneg %p249
      // Predicated region
      $region33: #{tpu_custom_call.1} parent=5 // pred_check
        _
      $region34: #{tpu_custom_call.1} parent=5 // pred_check_branch
        %252 = sbr.rel (%p249) target = $region36
      $region35: #{tpu_custom_call.1} parent=5 // pred_region
        %s253 = ssub.s32 %s19, 1
        %s254 = sand.u32 %s46, 1
        %s255 = scalar_lea.sflag [#allocation4], %s254
        %s256 = sand.u32 %s46, 1
        %s257 = smul.addr %s256, 8
        %s258 = scalar_lea.vmem [#allocation3], %s257
        // Predicated region
        $region37: #{tpu_custom_call.1} parent=35 // pred_check
          %p259 = pneg %p59
        $region38: #{tpu_custom_call.1} parent=35 // pred_check_branch
          %261 = sbr.rel (%p259) target = $region40
        $region39: #{tpu_custom_call.1} parent=35 // pred_region
          %262 = dma.done %s255, 128
        $region40: #{tpu_custom_call.1} parent=35 // pred_fallthru
          _
        %s263 = sand.u32 %s24, 1
        %s264 = scalar_lea.sflag [#allocation7], %s263
        %s265 = sand.u32 %s78, 1
        %s266 = smul.addr %s265, 4
        %s267 = scalar_lea.vmem [#allocation6], %s266
        // Predicated region
        $region41: #{tpu_custom_call.1} parent=35 // pred_check
          %p268 = pneg %p91
        $region42: #{tpu_custom_call.1} parent=35 // pred_check_branch
          %270 = sbr.rel (%p268) target = $region44
        $region43: #{tpu_custom_call.1} parent=35 // pred_region
          %271 = dma.done %s264, 64
        $region44: #{tpu_custom_call.1} parent=35 // pred_fallthru
          _
        // Predicated region
        $region45: #{tpu_custom_call.1} parent=35 // pred_check
          %p272 = pneg %p112
        $region46: #{tpu_custom_call.1} parent=35 // pred_check_branch
          %274 = sbr.rel (%p272) target = $region48
        $region47: #{tpu_custom_call.1} parent=35 // pred_region
          %275 = dma.done [#allocation7], 1728
        $region48: #{tpu_custom_call.1} parent=35 // pred_fallthru
          _
        %s276 = sand.u32 %s46, 1
        %s277 = scalar_lea.sflag [#allocation4], %s276
        %s278 = sand.u32 %s46, 1
        %s279 = smul.addr %s278, 8
        %s280 = scalar_lea.vmem [#allocation3], %s279
        %p281 = pneg %p59
        %p282 = pneg %p56
        %s283 = sand.u32 %s24, 1
        %s284 = scalar_lea.sflag [#allocation7], %s283
        %s285 = sand.u32 %s78, 1
        %s286 = smul.addr %s285, 4
        %s287 = scalar_lea.vmem [#allocation6], %s286
        %p288 = pneg %p91
        %p289 = pneg %p88
        %p290 = pneg %p112
        %p291 = pneg %p109
        %p292 = pneg %p133
        %p293 = pneg %p130
        %p294 = pneg %p161
        %p295 = pneg %p158
        %s296 = sand.u32 %s148, 1
        %s297 = scalar_lea.sflag [#allocation5], %s296
        %s298 = sand.u32 %s148, 1
        %s299 = smul.addr %s298, 16
        %s300 = scalar_lea.vmem [#allocation9], %s299
        %s301 = smul.u32 2, %s29
        %s302 = ssub.s32 3, %s301
        %p303 = scmp.lt.s32.totalorder %s302, 2
        %s304 = scalar_select %p303, %s302, 2
        %s305 = smul.u32 64, %s304
        %s306 = sadd.s32 %s29, 1
        %s307 = smul.u32 %s306, 2
        %s308 = smul.u32 2, %s29
        %v310 = vld [vmem:[%s258] sm:$0xf]
        %v311 = vld [vmem:[%s258 + $0x4] sm:$0xf]
        %vm312 = vcmask 584704
        %313 = vst.msk [vmem:[#allocation2] sm:$0xf] %vm312, %v310
        %314 = vst.msk [vmem:[#allocation2 + $0x4] sm:$0xf] %vm312, %v311
        %v315 = vld [vmem:[%s267] sm:$0x1]
        %vm316 = vcmask 581632
        %317 = vst.msk [vmem:[#allocation2 + $0x8] sm:$0x1] %vm316, %v315
        %v318 = vld [vmem:[#allocation2] sm:$0xf]
        %v319 = vld [vmem:[#allocation2 + $0x4] sm:$0xf]
        %v320 = vld [vmem:[#allocation8] sm:$0xf]
        %v321 = vld [vmem:[#allocation8 + $0x4] sm:$0xf]
        %v322 = vld [vmem:[#allocation8 + $0x8] sm:$0xf]
        %v323 = vld [vmem:[#allocation8 + $0xc] sm:$0xf]
        %v324 = vld [vmem:[#allocation8 + $0x10] sm:$0xf]
        %v325 = vld [vmem:[#allocation8 + $0x14] sm:$0xf]
        %v326 = vld [vmem:[#allocation8 + $0x18] sm:$0xf]
        %v327 = vld [vmem:[#allocation8 + $0x1c] sm:$0xf]
        %v328 = vld [vmem:[#allocation8 + $0x20] sm:$0xf]
        %v329 = vld [vmem:[#allocation2 + $0x8] sm:$0x1]
        %s330 = scalar_lea.vmem [#allocation8], 36
        %v331 = vld [vmem:[%s330] sm:$0xf]
        %v332 = vld [vmem:[%s330 + $0x4] sm:$0xf]
        %v333 = vld [vmem:[%s330 + $0x8] sm:$0xf]
        %v334 = vld [vmem:[%s330 + $0xc] sm:$0xf]
        %v335 = vld [vmem:[%s330 + $0x10] sm:$0xf]
        %v336 = vld [vmem:[%s330 + $0x14] sm:$0xf]
        %v337 = vld [vmem:[%s330 + $0x18] sm:$0xf]
        %v338 = vld [vmem:[%s330 + $0x1c] sm:$0xf]
        %v339 = vld [vmem:[%s330 + $0x20] sm:$0xf]
        %v343 = vunpack.c.l.b16 %v318
        %v344 = vunpack.c.l.b16 %v319
        %v345 = vunpack.c.l.b16 %v329
        %v346 = vpack.c.b16 %v344, %v343
        %v347 = vpack.c.b16 %v345, %v345
        %vm348 = vsmask.f32 7424
        %v350 = vshrl.u32 %v346, 16
        %v352 = vshll.u32 %v346, 16
        %v354 = vrot.slane %v352, 1
        %v355 = vor.u32 %v350, %v354
        %v357 = vshll.u32 %v347, 16
        %v359 = vrot.slane %v357, 1
        %v360 = vsel %vm348, %v355, %v359
        %v370 = vunpack.c.l.b16 %v331
        %v371 = vunpack.c.l.b16 %v332
        %v372 = vunpack.c.l.b16 %v333
        %v373 = vunpack.c.l.b16 %v334
        %v374 = vunpack.c.l.b16 %v335
        %v375 = vunpack.c.l.b16 %v336
        %v376 = vunpack.c.l.b16 %v337
        %v377 = vunpack.c.l.b16 %v338
        %v378 = vunpack.c.l.b16 %v339
        %v379 = vpack.c.b16 %v371, %v370
        %v380 = vpack.c.b16 %v373, %v372
        %v381 = vpack.c.b16 %v375, %v374
        %v382 = vpack.c.b16 %v377, %v376
        %v383 = vpack.c.b16 %v378, %v378
        %vm388 = vcmask 588800
        %v390 = vsel %vm388, %v360, 0
        %vm392 = vcmask 1043456
        %v394 = vsel %vm392, %v383, 0
        %396 = vmatprep.subr.bf16.mxu0 0
        %397 = vmatpush1.bf16.msra.mxu0 %v379
        %398 = vmatprep.subr.bf16.mxu0 0
        %399 = vmatpush1.bf16.msra.mxu0 %v380
        %400 = vmatprep.subr.bf16.mxu0 0
        %401 = vmatpush1.bf16.msra.mxu0 %v381
        %402 = vmatprep.subr.bf16.mxu0 0
        %403 = vmatpush1.bf16.msra.mxu0 %v382
        %404 = vmatprep.subr.bf16.mxu0 0
        %405 = vmatpush1.bf16.msra.mxu0 %v394
        %406 = vmatprep.subr.bf16.mxu0 0
        %407 = vmatpush1.bf16.msra.mxu0 0
        %408 = vmatprep.subr.bf16.mxu0 0
        %409 = vmatpush1.bf16.msra.mxu0 0
        %410 = vmatprep.subr.bf16.mxu0 0
        %411 = vmatpush1.bf16.msra.mxu0 0
        %412 = vmatprep.subr.bf16.mxu0 0
        %413 = vmatpush1.bf16.msra.mxu0 0
        %414 = vmatprep.subr.bf16.mxu0 0
        %415 = vmatpush1.bf16.msra.mxu0 0
        %416 = vmatprep.subr.bf16.mxu0 0
        %417 = vmatpush1.bf16.msra.mxu0 0
        %418 = vmatprep.subr.bf16.mxu0 0
        %419 = vmatpush1.bf16.msra.mxu0 0
        %420 = vmatprep.subr.bf16.mxu0 0
        %421 = vmatpush1.bf16.msra.mxu0 0
        %422 = vmatprep.subr.bf16.mxu0 0
        %423 = vmatpush1.bf16.msra.mxu0 0
        %424 = vmatprep.subr.bf16.mxu0 0
        %425 = vmatpush1.bf16.msra.mxu0 0
        %426 = vmatprep.subr.bf16.mxu0 0
        %427 = vmatpush1.bf16.msra.mxu0 0
        %428 = vmatprep.mubr.bf16.mxu0 0
        %429 = vmatmul.mubr.bf16.gmra.mrb[0].mxu0 %v390
        %v430 = vpop.f32.mrb[0].mxu0
        %v431 = vadd.f32 0.0, %v430
        %v432 = vpop.f32.mrb[0].mxu0
        %v433 = vpop.f32.mrb[0].mxu0
        %v434 = vadd.f32 0.0, %v433
        %v435 = vpop.f32.mrb[0].mxu0
        %436 = vdwg.mxu0
        %v446 = vunpack.c.l.b16 %v320
        %v447 = vunpack.c.l.b16 %v321
        %v448 = vunpack.c.l.b16 %v322
        %v449 = vunpack.c.l.b16 %v323
        %v450 = vunpack.c.l.b16 %v324
        %v451 = vunpack.c.l.b16 %v325
        %v452 = vunpack.c.l.b16 %v326
        %v453 = vunpack.c.l.b16 %v327
        %v454 = vunpack.c.l.b16 %v328
        %v455 = vpack.c.b16 %v447, %v446
        %v456 = vpack.c.b16 %v449, %v448
        %v457 = vpack.c.b16 %v451, %v450
        %v458 = vpack.c.b16 %v453, %v452
        %v459 = vpack.c.b16 %v454, %v454
        %v464 = vsel %vm388, %v346, 0
        %v467 = vsel %vm392, %v459, 0
        %469 = vmatprep.subr.bf16.mxu0 0
        %470 = vmatpush1.bf16.msra.mxu0 %v455
        %471 = vmatprep.subr.bf16.mxu0 0
        %472 = vmatpush1.bf16.msra.mxu0 %v456
        %473 = vmatprep.subr.bf16.mxu0 0
        %474 = vmatpush1.bf16.msra.mxu0 %v457
        %475 = vmatprep.subr.bf16.mxu0 0
        %476 = vmatpush1.bf16.msra.mxu0 %v458
        %477 = vmatprep.subr.bf16.mxu0 0
        %478 = vmatpush1.bf16.msra.mxu0 %v467
        %479 = vmatprep.subr.bf16.mxu0 0
        %480 = vmatpush1.bf16.msra.mxu0 0
        %481 = vmatprep.subr.bf16.mxu0 0
        %482 = vmatpush1.bf16.msra.mxu0 0
        %483 = vmatprep.subr.bf16.mxu0 0
        %484 = vmatpush1.bf16.msra.mxu0 0
        %485 = vmatprep.subr.bf16.mxu0 0
        %486 = vmatpush1.bf16.msra.mxu0 0
        %487 = vmatprep.subr.bf16.mxu0 0
        %488 = vmatpush1.bf16.msra.mxu0 0
        %489 = vmatprep.subr.bf16.mxu0 0
        %490 = vmatpush1.bf16.msra.mxu0 0
        %491 = vmatprep.subr.bf16.mxu0 0
        %492 = vmatpush1.bf16.msra.mxu0 0
        %493 = vmatprep.subr.bf16.mxu0 0
        %494 = vmatpush1.bf16.msra.mxu0 0
        %495 = vmatprep.subr.bf16.mxu0 0
        %496 = vmatpush1.bf16.msra.mxu0 0
        %497 = vmatprep.subr.bf16.mxu0 0
        %498 = vmatpush1.bf16.msra.mxu0 0
        %499 = vmatprep.subr.bf16.mxu0 0
        %500 = vmatpush1.bf16.msra.mxu0 0
        %501 = vmatprep.mubr.bf16.mxu0 0
        %502 = vmatmul.mubr.bf16.gmra.mrb[0].mxu0 %v464
        %v503 = vpop.f32.mrb[0].mxu0
        %v504 = vadd.f32 %v431, %v503
        %v505 = vpop.f32.mrb[0].mxu0
        %v506 = vpop.f32.mrb[0].mxu0
        %v507 = vadd.f32 %v434, %v506
        %v508 = vpop.f32.mrb[0].mxu0
        %509 = vdwg.mxu0
        %v510 = vld [vmem:[#allocation2] sm:$0xe]
        %s511 = scalar_lea.vmem [#allocation8], 72
        %v512 = vld [vmem:[%s511] sm:$0xf]
        %v513 = vld [vmem:[%s511 + $0x4] sm:$0xf]
        %v514 = vld [vmem:[%s511 + $0x8] sm:$0xf]
        %v515 = vld [vmem:[%s511 + $0xc] sm:$0xf]
        %v516 = vld [vmem:[%s511 + $0x10] sm:$0xf]
        %v517 = vld [vmem:[%s511 + $0x14] sm:$0xf]
        %v518 = vld [vmem:[%s511 + $0x18] sm:$0xf]
        %v519 = vld [vmem:[%s511 + $0x1c] sm:$0xf]
        %v520 = vld [vmem:[%s511 + $0x20] sm:$0xf]
        %v522 = vunpack.c.l.b16 %v510
        %v523 = vpack.c.b16 %v344, %v522
        %vm524 = vcmask 1046528
        %v525 = vrot.slane %v523, 1
        %v526 = vrot.slane %v347, 1
        %v527 = vsel %vm524, %v525, %v526
        %v537 = vunpack.c.l.b16 %v512
        %v538 = vunpack.c.l.b16 %v513
        %v539 = vunpack.c.l.b16 %v514
        %v540 = vunpack.c.l.b16 %v515
        %v541 = vunpack.c.l.b16 %v516
        %v542 = vunpack.c.l.b16 %v517
        %v543 = vunpack.c.l.b16 %v518
        %v544 = vunpack.c.l.b16 %v519
        %v545 = vunpack.c.l.b16 %v520
        %v546 = vpack.c.b16 %v538, %v537
        %v547 = vpack.c.b16 %v540, %v539
        %v548 = vpack.c.b16 %v542, %v541
        %v549 = vpack.c.b16 %v544, %v543
        %v550 = vpack.c.b16 %v545, %v545
        %v556 = vsel %vm388, %v527, 0
        %v559 = vsel %vm392, %v550, 0
        %561 = vmatprep.subr.bf16.mxu0 0
        %562 = vmatpush1.bf16.msra.mxu0 %v546
        %563 = vmatprep.subr.bf16.mxu0 0
        %564 = vmatpush1.bf16.msra.mxu0 %v547
        %565 = vmatprep.subr.bf16.mxu0 0
        %566 = vmatpush1.bf16.msra.mxu0 %v548
        %567 = vmatprep.subr.bf16.mxu0 0
        %568 = vmatpush1.bf16.msra.mxu0 %v549
        %569 = vmatprep.subr.bf16.mxu0 0
        %570 = vmatpush1.bf16.msra.mxu0 %v559
        %571 = vmatprep.subr.bf16.mxu0 0
        %572 = vmatpush1.bf16.msra.mxu0 0
        %573 = vmatprep.subr.bf16.mxu0 0
        %574 = vmatpush1.bf16.msra.mxu0 0
        %575 = vmatprep.subr.bf16.mxu0 0
        %576 = vmatpush1.bf16.msra.mxu0 0
        %577 = vmatprep.subr.bf16.mxu0 0
        %578 = vmatpush1.bf16.msra.mxu0 0
        %579 = vmatprep.subr.bf16.mxu0 0
        %580 = vmatpush1.bf16.msra.mxu0 0
        %581 = vmatprep.subr.bf16.mxu0 0
        %582 = vmatpush1.bf16.msra.mxu0 0
        %583 = vmatprep.subr.bf16.mxu0 0
        %584 = vmatpush1.bf16.msra.mxu0 0
        %585 = vmatprep.subr.bf16.mxu0 0
        %586 = vmatpush1.bf16.msra.mxu0 0
        %587 = vmatprep.subr.bf16.mxu0 0
        %588 = vmatpush1.bf16.msra.mxu0 0
        %589 = vmatprep.subr.bf16.mxu0 0
        %590 = vmatpush1.bf16.msra.mxu0 0
        %591 = vmatprep.subr.bf16.mxu0 0
        %592 = vmatpush1.bf16.msra.mxu0 0
        %593 = vmatprep.mubr.bf16.mxu0 0
        %594 = vmatmul.mubr.bf16.gmra.mrb[0].mxu0 %v556
        %v595 = vpop.f32.mrb[0].mxu0
        %v596 = vadd.f32 0.0, %v595
        %v597 = vpop.f32.mrb[0].mxu0
        %v598 = vpop.f32.mrb[0].mxu0
        %v599 = vadd.f32 0.0, %v598
        %v600 = vpop.f32.mrb[0].mxu0
        %601 = vdwg.mxu0
        %v602 = vadd.f32 %v504, %v596
        %v603 = vadd.f32 %v507, %v599
        %v604 = vld [vmem:[%s3] sm:$0x1]
        %v606 = vlaneseq
        %v607 = vshrl.u32 %v606, 7
        %v608 = vsub.s32 0, %v607
        %v609 = vrot.slane %v604, %v608
        %v611 = vadd.f32 %v602, %v609
        %v612 = vadd.f32 %v603, %v609
        %v613 = vxor.u32 %v611, 2147483648
        %v614 = vxor.u32 %v612, 2147483648
        %v615 = vmul.f32 %v613, 1.442695
        %v616 = vpow.pop %v615
        %v617 = vmul.f32 %v614, 1.442695
        %v618 = vpow.pop %v617
        %v619 = vadd.f32 %v616, 1.0
        %v620 = vadd.f32 %v618, 1.0
        %v621 = vrcp.pop %v619
        %v622 = vmul.f32 1.0, %v621
        %v623 = vrcp.pop %v620
        %v624 = vmul.f32 1.0, %v623
        %v625 = vmul.f32 %v611, %v622
        %v626 = vmul.f32 %v612, %v624
        %627 = vst [vmem:[%s300] sm:$0xff] %v625
        %628 = vst [vmem:[%s300 + $0x8] sm:$0xff] %v626
        %s629 = sand.u32 %s148, 1
        %s630 = scalar_lea.sflag [#allocation5], %s629
        %s631 = sand.u32 %s148, 1
        %s632 = smul.addr %s631, 16
        %s633 = scalar_lea.vmem [#allocation9], %s632
        // Predicated region
        $region49: #{tpu_custom_call.1} parent=35 // pred_check
          %p634 = pneg %p158
        $region50: #{tpu_custom_call.1} parent=35 // pred_check_branch
          %636 = sbr.rel (%p634) target = $region52
        $region51: #{tpu_custom_call.1} parent=35 // pred_region
          %s637 = smul.u32 2, %s29
          %s639 = ssub.s32 256, 256
          %640 = vsyncadd %s630, %s639
          %s641 = smul.addr %s28, 2
          %s642 = sadd.s32 %s637, %s641
          %s643 = smul.addr %s642, 128
          %s644 = scalar_lea.hbm %s4, %s643
          %s645 = sshll.u32 %s633, 4
          %s646 = int_to_ptr.vmem [resolvable:$true] %s645
          %651 = dma.vmem_to_hbm [thread:$0]  %s646, 256, %s644, %s630, 128, 128, 8
        $region52: #{tpu_custom_call.1} parent=35 // pred_fallthru
          _
      $region36: #{tpu_custom_call.1} parent=5 // pred_fallthru
        _
      %p652 = scmp.le.s32.totalorder 2, %s19
      // Predicated region
      $region53: #{tpu_custom_call.1} parent=5 // pred_check
        %p653 = pneg %p652
      $region54: #{tpu_custom_call.1} parent=5 // pred_check_branch
        %655 = sbr.rel (%p653) target = $region56
      $region55: #{tpu_custom_call.1} parent=5 // pred_region
        %s656 = ssub.s32 %s19, 2
        // Predicated region
        $region57: #{tpu_custom_call.1} parent=55 // pred_check
          %p657 = pneg %p164
        $region58: #{tpu_custom_call.1} parent=55 // pred_check_branch
          %659 = sbr.rel (%p657) target = $region60
        $region59: #{tpu_custom_call.1} parent=55 // pred_region
          %s660 = sand.u32 %s149, 1
          %s661 = scalar_lea.sflag [#allocation5], %s660
          %s662 = sand.u32 %s149, 1
          %s663 = smul.addr %s662, 16
          %s664 = scalar_lea.vmem [#allocation9], %s663
          %665 = dma.done %s661, 256
        $region60: #{tpu_custom_call.1} parent=55 // pred_fallthru
          _
      $region56: #{tpu_custom_call.1} parent=5 // pred_fallthru
        _
    $region6: #{tpu_custom_call.1} parent=1 // loop_footer
      %s23 = sadd.s32 1, %s19
    $region7: #{tpu_custom_call.1} parent=1 // loop_footer_branch
      %18 = sbr.rel target = $region3
    $region8: #{tpu_custom_call.1} parent=1 // loop_exit
      _
    %666 = vsyncpa [#allocation4], 1
    %s667 = scalar_lea.sflag [#allocation4], 1
    %668 = vsyncpa %s667, 1
    %669 = vsyncpa [#allocation7], 1
    %s670 = scalar_lea.sflag [#allocation7], 1
    %671 = vsyncpa %s670, 1
    %672 = vsyncpa [#allocation5], 1
    %s673 = scalar_lea.sflag [#allocation5], 1
    %674 = vsyncpa %s673, 1

</llo_original>
